<compile_context>
chip_gen: v5e
topology: v5e:2x2
jax: 0.10.0
libtpu: 0.0.40
codegen_flags: <defaults>
</compile_context>

<pallas_src>
import jax
import jax.numpy as jnp
from jax.experimental import pallas as pl
from jax.experimental.pallas import tpu as pltpu

_LANE = 128


def _round_up(x: int, m: int) -> int:
    return ((x + m - 1) // m) * m


def _sublane_for(dtype) -> int:
    # Native sublane tile: 8 rows of 32-bit, 16 rows of bf16, 32 rows of int8/fp8.
    return max(8, 32 // jnp.dtype(dtype).itemsize)


def _vmem_capacity_bytes() -> int:
    try:
        return int(pltpu.get_tpu_info().vmem_capacity_bytes)
    except Exception:
        return 128 << 20  # v5e/v6e default; conservative if query unavailable


def _resident_spec(shape):
    """BlockSpec for a block that is identical for every grid step.

    Constant index_map keeps it VMEM-resident; Buffered(1) avoids allocating a
    pointless second pipeline buffer (halves resident weight VMEM footprint).
    """
    index_map = lambda *_: (0,) * len(shape)
    try:
        return pl.BlockSpec(shape, index_map, pipeline_mode=pl.Buffered(1))
    except TypeError:  # older BlockSpec signature without pipeline_mode
        return pl.BlockSpec(shape, index_map)


def _make_mlp_kernel(num_layers: int, activation: str):
    """Fused kernel: all Linear layers + hidden activations in one body."""

    def act(h):  # h is f32
        if activation == "sigmoid":
            # exp + approximate reciprocal both run on the EUP slot,
            # which is idle between matmuls -> near-free epilogue.
            return pl.reciprocal(1.0 + jnp.exp(-h), approx=True)
        elif activation == "relu":
            return jnp.maximum(h, 0.0)
        elif activation == "tanh":
            return jnp.tanh(h)
        elif activation in (None, "linear"):
            return h
        raise ValueError(f"activation {activation!r} not supported")

    def kernel(*refs):
        # refs = (x_ref, w0_ref, b0_ref, w1_ref, b1_ref, ..., o_ref)
        x_ref = refs[0]
        o_ref = refs[-1]
        wb_refs = refs[1:-1]
        compute_dtype = x_ref.dtype

        h = x_ref[...]  # [tile_m, in_pad], already in compute dtype
        for i in range(num_layers):
            w = wb_refs[2 * i][...]      # [in_pad_i, out_pad_i], compute dtype
            b = wb_refs[2 * i + 1][...]  # [1, out_pad_i], f32
            z = jnp.dot(h, w, preferred_element_type=jnp.float32) + b
            if i < num_layers - 1:
                z = act(z)
                # nn.Dropout(p=0.0) -> identity.
                h = z.astype(compute_dtype)
            else:
                h = z  # keep the last layer in the f32 accumulator
        o_ref[...] = h.astype(o_ref.dtype)

    return kernel


def mlp_forward(x, weights_t, biases, activation: str = "sigmoid",
                dor: float = 0.0, compute_dtype=jnp.float32,
                out_dtype=jnp.float32, tile_m: int = 512):
    """Run the fused MLP kernel.

    Args:
      x: [batch, input_dim] float32.
      weights_t: list of [in_i, out_i] float32 (PyTorch weight.T).
      biases: list of [out_i] float32.
      compute_dtype: matmul operand dtype (f32, or bf16 for the v6e/v7x MXU
        fast path; accumulation is always f32).
      out_dtype: dtype of the returned logits (bf16 halves output DMA traffic).
      tile_m: requested batch tile; shrunk automatically to fit the VMEM budget.
    Returns:
      [batch, layers[-1]] array in out_dtype.
    """
    # TODO(synk): dor > 0 not implemented in-kernel (module default is 0.0).
    assert dor == 0.0, "dropout with dor > 0 is not implemented in the kernel"

    batch, in_dim = x.shape
    num_layers = len(weights_t)
    out_dim = weights_t[-1].shape[1]

    itemsize = jnp.dtype(compute_dtype).itemsize
    out_itemsize = jnp.dtype(out_dtype).itemsize

    # Lane-dense padding of all feature dims to multiples of 128.
    dims = [in_dim] + [w.shape[1] for w in weights_t]
    dims_pad = [_round_up(d, _LANE) for d in dims]
    in_pad, out_pad = dims_pad[0], dims_pad[-1]

    # --- VMEM budget (chip-aware: 128 MiB on v5e/v6e, 64 MiB on v7x) --------
    vmem_cap = _vmem_capacity_bytes()
    budget = (vmem_cap * 3) // 4  # headroom for Mosaic internal scratch

    # Resident weights/biases are single-buffered (Buffered(1)).
    weight_bytes = sum(dims_pad[i] * dims_pad[i + 1] * itemsize + dims_pad[i + 1] * 4
                       for i in range(num_layers))
    # TODO(synk): stream weights per layer if they don't fit; not needed here.
    assert weight_bytes < budget, (
        f"padded weights ({weight_bytes} B) exceed VMEM budget ({budget} B); "
        "per-layer weight streaming is not implemented")

    def vmem_need(tm_):
        io = 2 * tm_ * in_pad * itemsize + 2 * tm_ * out_pad * out_itemsize  # dbl-buffered x/out
        act_bytes = 2 * tm_ * max(dims_pad) * 4                              # f32 intermediates
        return weight_bytes + io + act_bytes

    # --- batch tiling --------------------------------------------------------
    sub = _sublane_for(compute_dtype)
    batch_pad = _round_up(batch, sub)
    tm = _round_up(min(tile_m, batch_pad), sub)
    while tm > sub and vmem_need(tm) > budget:
        tm = _round_up(tm // 2, sub)
    # v7x has 2 TensorCores: make sure the "parallel" axis has >= 2 steps
    # whenever the batch is large enough to split.
    if batch_pad // tm < 2 and batch_pad >= 2 * sub:
        tm = _round_up(pl.cdiv(batch_pad, 2), sub)
    batch_pad = _round_up(batch_pad, tm)
    grid = (batch_pad // tm,)

    vmem_limit = int(min(budget, max(2 * vmem_need(tm), 16 << 20)))

    # --- padded inputs / params ---------------------------------------------
    xp = jnp.zeros((batch_pad, in_pad), compute_dtype)
    xp = xp.at[:batch, :in_dim].set(x.astype(compute_dtype))

    args = [xp]
    in_specs = [pl.BlockSpec((tm, in_pad), lambda i: (i, 0))]

    for li, (w, b) in enumerate(zip(weights_t, biases)):
        ip, op = dims_pad[li], dims_pad[li + 1]
        wp = jnp.zeros((ip, op), compute_dtype)
        wp = wp.at[: w.shape[0], : w.shape[1]].set(w.astype(compute_dtype))
        bp = jnp.zeros((1, op), jnp.float32)
        bp = bp.at[0, : b.shape[0]].set(b.astype(jnp.float32))
        args += [wp, bp]
        in_specs += [_resident_spec((ip, op)), _resident_spec((1, op))]

    out_specs = pl.BlockSpec((tm, out_pad), lambda i: (i, 0))

    # --- cost hint for the XLA scheduler -------------------------------------
    flops = 2 * batch_pad * sum(dims_pad[i] * dims_pad[i + 1] for i in range(num_layers))
    transcendentals = (batch_pad * sum(dims_pad[1:-1])
                       if activation in ("sigmoid", "tanh") else 0)
    bytes_accessed = (sum(int(a.size) * a.dtype.itemsize for a in args)
                      + batch_pad * out_pad * out_itemsize)
    cost = pl.CostEstimate(flops=flops, transcendentals=transcendentals,
                           bytes_accessed=bytes_accessed)

    kernel = _make_mlp_kernel(num_layers, activation)
    out_padded = pl.pallas_call(
        kernel,
        out_shape=jax.ShapeDtypeStruct((batch_pad, out_pad), out_dtype),
        grid=grid,
        in_specs=in_specs,
        out_specs=out_specs,
        compiler_params=pltpu.CompilerParams(
            dimension_semantics=("parallel",),
            vmem_limit_bytes=vmem_limit),
        cost_estimate=cost,
    )(*args)

    # Slice padded logit columns / padded batch rows back outside the kernel.
    return out_padded[:batch, :out_dim]


def init_mlp_params(key, input_dim: int, layers: list, init_kind: str = "uniform"):
    """Deterministic parameter init matching MLP._init_weights_and_biases.

    Returns weights already transposed to [in, out] and zero biases.
    """
    weights_t, biases = [], []
    in_dim = input_dim
    for out_dim in layers:
        key, wkey = jax.random.split(key)
        if init_kind == "zeros":
            w = jnp.zeros((out_dim, in_dim), jnp.float32)
        elif init_kind == "uniform":
            w = jax.random.uniform(wkey, (out_dim, in_dim), jnp.float32,
                                   minval=-0.1, maxval=0.1)
        elif init_kind == "normal":
            w = 0.001 * jax.random.normal(wkey, (out_dim, in_dim), jnp.float32)
        elif init_kind == "xavier":
            limit = (6.0 / (in_dim + out_dim)) ** 0.5
            w = jax.random.uniform(wkey, (out_dim, in_dim), jnp.float32,
                                   minval=-limit, maxval=limit)
        else:
            raise ValueError(init_kind)
        weights_t.append(w.T)                      # [in, out] for the kernel
        biases.append(jnp.zeros((out_dim,), jnp.float32))
        in_dim = out_dim
    return weights_t, biases


def mlp_forward_ref(x, weights_t, biases, activation: str = "sigmoid"):
    """Pure-JAX reference for correctness check."""
    h = x
    n = len(weights_t)
    for i, (w, b) in enumerate(zip(weights_t, biases)):
        h = h @ w + b
        if i < n - 1:
            if activation == "sigmoid":
                h = jax.nn.sigmoid(h)
            elif activation == "relu":
                h = jnp.maximum(h, 0.0)
            elif activation == "tanh":
                h = jnp.tanh(h)
    return h


if __name__ == "__main__":
    key = jax.random.PRNGKey(0)

    # Shapes consistent with the module: MLP(input_dim=32, layers=[64, 10],
    # activation='sigmoid', init_kind='uniform', dor=0.0)
    batch = 8
    input_dim = 32
    layers = [64, 10]  # last layer = 10 classes

    key, xkey, pkey = jax.random.split(key, 3)
    x = jax.random.normal(xkey, (batch, input_dim), jnp.float32)
    weights_t, biases = init_mlp_params(pkey, input_dim, layers, init_kind="uniform")

    ref = mlp_forward_ref(x, weights_t, biases, activation="sigmoid")

    # f32 path (tolerance covers the approx-reciprocal sigmoid).
    out_f32 = jax.block_until_ready(
        mlp_forward(x, weights_t, biases, activation="sigmoid",
                    compute_dtype=jnp.float32))
    assert out_f32.shape == (batch, layers[-1]), out_f32.shape
    assert jnp.allclose(out_f32, ref, atol=5e-3, rtol=5e-3), "f32 mismatch vs JAX reference"

    # bf16-operand / f32-accumulate path (v6e/v7x MXU fast path).
    out_bf16 = jax.block_until_ready(
        mlp_forward(x, weights_t, biases, activation="sigmoid",
                    compute_dtype=jnp.bfloat16))
    assert out_bf16.shape == (batch, layers[-1]), out_bf16.shape
    assert jnp.allclose(out_bf16, ref, atol=5e-2, rtol=5e-2), "bf16 mismatch vs JAX reference"

    print("KERNEL_OK")
</pallas_src>

<mosaic_0001>
module attributes {stable_mosaic.version = 11 : i64} {
  func.func @kernel(%arg0: i32, %arg1: memref<8x128xf32, #tpu.memory_space<vmem>>, %arg2: memref<128x128xf32, #tpu.memory_space<vmem>>, %arg3: memref<1x128xf32, #tpu.memory_space<vmem>>, %arg4: memref<128x128xf32, #tpu.memory_space<vmem>>, %arg5: memref<1x128xf32, #tpu.memory_space<vmem>>, %arg6: memref<8x128xf32, #tpu.memory_space<vmem>>) attributes {dimension_semantics = [#tpu.dimension_semantics<parallel>], iteration_bounds = array<i64: 1>, scalar_prefetch = 0 : i64, scratch_operands = 0 : i64, tpu.core_type = #tpu.core_type<tc>, window_params = [{transform_indices = @transform_0, window_bounds = array<i64: 8, 128>}, {pipeline_mode = #tpu.pipeline_mode<synchronous>, transform_indices = @transform_1, window_bounds = array<i64: 128, 128>}, {pipeline_mode = #tpu.pipeline_mode<synchronous>, transform_indices = @transform_2, window_bounds = array<i64: 1, 128>}, {pipeline_mode = #tpu.pipeline_mode<synchronous>, transform_indices = @transform_3, window_bounds = array<i64: 128, 128>}, {pipeline_mode = #tpu.pipeline_mode<synchronous>, transform_indices = @transform_4, window_bounds = array<i64: 1, 128>}, {transform_indices = @transform_5, window_bounds = array<i64: 8, 128>}]} {
    %c0 = arith.constant 0 : index
    %c0_0 = arith.constant 0 : index
    %0 = vector.load %arg1[%c0, %c0_0] : memref<8x128xf32, #tpu.memory_space<vmem>>, vector<8x128xf32>
    %c0_1 = arith.constant 0 : index
    %c0_2 = arith.constant 0 : index
    %1 = vector.load %arg2[%c0_1, %c0_2] : memref<128x128xf32, #tpu.memory_space<vmem>>, vector<128x128xf32>
    %c0_3 = arith.constant 0 : index
    %c0_4 = arith.constant 0 : index
    %2 = vector.load %arg3[%c0_3, %c0_4] : memref<1x128xf32, #tpu.memory_space<vmem>>, vector<1x128xf32>
    %cst = arith.constant dense<0.000000e+00> : vector<8x128xf32>
    %3 = tpu.matmul %0, %1, %cst {dimension_numbers = #tpu.dot_dimension_numbers<[1], [0], [0], [1], [0, 0, 1, 1], [], []>} : vector<8x128xf32>, vector<128x128xf32>, vector<8x128xf32> -> vector<8x128xf32>
    %4 = vector.broadcast %2 : vector<1x128xf32> to vector<8x128xf32>
    %5 = arith.addf %3, %4 : vector<8x128xf32>
    %cst_5 = arith.constant 0.000000e+00 : f32
    %6 = vector.broadcast %cst_5 : f32 to vector<8x128xf32>
    %7 = arith.subf %6, %5 : vector<8x128xf32>
    %8 = math.exp %7 : vector<8x128xf32>
    %cst_6 = arith.constant 1.000000e+00 : f32
    %9 = vector.broadcast %cst_6 : f32 to vector<8x128xf32>
    %10 = arith.addf %9, %8 : vector<8x128xf32>
    %11 = tpu.reciprocal %10 {approx = true} : vector<8x128xf32> -> vector<8x128xf32>
    %c0_7 = arith.constant 0 : index
    %c0_8 = arith.constant 0 : index
    %12 = vector.load %arg4[%c0_7, %c0_8] : memref<128x128xf32, #tpu.memory_space<vmem>>, vector<128x128xf32>
    %c0_9 = arith.constant 0 : index
    %c0_10 = arith.constant 0 : index
    %13 = vector.load %arg5[%c0_9, %c0_10] : memref<1x128xf32, #tpu.memory_space<vmem>>, vector<1x128xf32>
    %cst_11 = arith.constant dense<0.000000e+00> : vector<8x128xf32>
    %14 = tpu.matmul %11, %12, %cst_11 {dimension_numbers = #tpu.dot_dimension_numbers<[1], [0], [0], [1], [0, 0, 1, 1], [], []>} : vector<8x128xf32>, vector<128x128xf32>, vector<8x128xf32> -> vector<8x128xf32>
    %15 = vector.broadcast %13 : vector<1x128xf32> to vector<8x128xf32>
    %16 = arith.addf %14, %15 : vector<8x128xf32>
    %c0_12 = arith.constant 0 : index
    %c0_13 = arith.constant 0 : index
    %17 = vector.load %arg6[%c0_12, %c0_13] : memref<8x128xf32, #tpu.memory_space<vmem>>, vector<8x128xf32>
    tpu.vector_store %arg6[%c0_12, %c0_13], %16 {strides = array<i32>} : memref<8x128xf32, #tpu.memory_space<vmem>>, vector<8x128xf32>,
    return
  }
  func.func @transform_0(%arg0: i32) -> (i32, i32) {
    %c0_i32 = arith.constant 0 : i32
    %c0_i32_0 = arith.constant 0 : i32
    return %arg0, %c0_i32 : i32, i32
  }
  func.func @transform_1(%arg0: i32) -> (i32, i32) {
    %c0_i32 = arith.constant 0 : i32
    %c0_i32_0 = arith.constant 0 : i32
    %c0_i32_1 = arith.constant 0 : i32
    return %c0_i32, %c0_i32_0 : i32, i32
  }
  func.func @transform_2(%arg0: i32) -> (i32, i32) {
    %c0_i32 = arith.constant 0 : i32
    %c0_i32_0 = arith.constant 0 : i32
    %c0_i32_1 = arith.constant 0 : i32
    return %c0_i32, %c0_i32_0 : i32, i32
  }
  func.func @transform_3(%arg0: i32) -> (i32, i32) {
    %c0_i32 = arith.constant 0 : i32
    %c0_i32_0 = arith.constant 0 : i32
    %c0_i32_1 = arith.constant 0 : i32
    return %c0_i32, %c0_i32_0 : i32, i32
  }
  func.func @transform_4(%arg0: i32) -> (i32, i32) {
    %c0_i32 = arith.constant 0 : i32
    %c0_i32_0 = arith.constant 0 : i32
    %c0_i32_1 = arith.constant 0 : i32
    return %c0_i32, %c0_i32_0 : i32, i32
  }
  func.func @transform_5(%arg0: i32) -> (i32, i32) {
    %c0_i32 = arith.constant 0 : i32
    %c0_i32_0 = arith.constant 0 : i32
    return %arg0, %c0_i32 : i32, i32
  }
}

</mosaic_0001>

<llo_original>
// kernel: tpu_custom_call.1
$region0: #{tpu_custom_call.1}
  #allocation0 [shape = 'u32[]', space=smem, size = 0x4, offset = 0x4, fixed_abs, tag = 'smem constant byte address 0x4 - core index']
  #allocation1 [shape = 'u32[72,128]{1,0:T(1,128)}', space=vmem, size = 0x9000, scoped, tag = 'internal scratch']
  %s0 = inlined_call_operand.hbm [shape: f32[8,128], index: 0, kind: input, shape index: {}]
  %s1 = inlined_call_operand.hbm [shape: f32[128,128], index: 1, kind: input, shape index: {}]
  %s2 = inlined_call_operand.vmem [shape: f32[1,128], index: 2, kind: input, shape index: {}]
  %s3 = inlined_call_operand.hbm [shape: f32[128,128], index: 3, kind: input, shape index: {}]
  %s4 = inlined_call_operand.vmem [shape: f32[1,128], index: 4, kind: input, shape index: {}]
  %s5 = inlined_call_operand.hbm [shape: f32[8,128], index: 5, kind: output, shape index: {}]
  %s6 = sld [smem:[#allocation0]]
  $region42: #{tpu_custom_call.1} parent=0
    _
  %s8 = ssub.s32 1, %s6
  %s9 = scalar_select 0, %s8, %s6
  $region1: #{tpu_custom_call.1} parent=0
    #allocation2 [shape = 'u8[4096]{0}', space=vmem, size = 0x1000, scoped, tag = 'input window, operand 0, single buffered']
    #allocation3 [shape = 's32[1]{0}', space=sflag, size = 0x4, scoped, tag = 'scoped memory for tpu_custom_call.1']
    #allocation4 [shape = 's32[1]{0}', space=sflag, size = 0x4, scoped, tag = 'scoped memory for tpu_custom_call.1']
    #allocation5 [shape = 'u8[65536]{0}', space=vmem, size = 0x10000, scoped, tag = 'input window, operand 1, single buffered']
    #allocation6 [shape = 's32[1]{0}', space=sflag, size = 0x4, scoped, tag = 'scoped memory for tpu_custom_call.1']
    #allocation7 [shape = 'u8[65536]{0}', space=vmem, size = 0x10000, scoped, tag = 'input window, operand 3, single buffered']
    #allocation8 [shape = 'u8[4096]{0}', space=vmem, size = 0x1000, scoped, tag = 'output window, operand 0, single buffered']
    %10 = vsyncpa [#allocation3], 0
    %11 = vsyncpa [#allocation6], 0
    %12 = vsyncpa [#allocation4], 0
    // Predicated region
    $region2: #{tpu_custom_call.1} parent=1 // pred_check
      _
    $region3: #{tpu_custom_call.1} parent=1 // pred_check_branch
      %14 = sbr.rel (0) target = $region5
    $region4: #{tpu_custom_call.1} parent=1 // pred_region
      %16 = vsyncadd [#allocation3], 0
      %s18 = sshll.u32 %s0, 4
      %s19 = int_to_ptr.hbm [resolvable:$true] %s18
      %s20 = sshll.u32 [#allocation2], 4
      %s21 = int_to_ptr.vmem [resolvable:$true] %s20
      %23 = dma.hbm_to_vmem [thread:$0]  %s19, 128, %s21, [#allocation3]
    $region5: #{tpu_custom_call.1} parent=1 // pred_fallthru
      _
    // Predicated region
    $region6: #{tpu_custom_call.1} parent=1 // pred_check
      _
    $region7: #{tpu_custom_call.1} parent=1 // pred_check_branch
      %25 = sbr.rel (0) target = $region9
    $region8: #{tpu_custom_call.1} parent=1 // pred_region
      %27 = vsyncadd [#allocation6], 0
      %s28 = sshll.u32 %s1, 4
      %s29 = int_to_ptr.hbm [resolvable:$true] %s28
      %s30 = sshll.u32 [#allocation5], 4
      %s31 = int_to_ptr.vmem [resolvable:$true] %s30
      %36 = dma.hbm_to_vmem [thread:$0]  %s29, 2048, %s31, [#allocation6], 128, 128, 8
    $region9: #{tpu_custom_call.1} parent=1 // pred_fallthru
      _
    // Predicated region
    $region10: #{tpu_custom_call.1} parent=1 // pred_check
      _
    $region11: #{tpu_custom_call.1} parent=1 // pred_check_branch
      %38 = sbr.rel (0) target = $region13
    $region12: #{tpu_custom_call.1} parent=1 // pred_region
      _
    $region13: #{tpu_custom_call.1} parent=1 // pred_fallthru
      _
    // Predicated region
    $region14: #{tpu_custom_call.1} parent=1 // pred_check
      _
    $region15: #{tpu_custom_call.1} parent=1 // pred_check_branch
      %40 = sbr.rel (0) target = $region17
    $region16: #{tpu_custom_call.1} parent=1 // pred_region
      %42 = vsyncadd [#allocation6], 0
      %s43 = sshll.u32 %s3, 4
      %s44 = int_to_ptr.hbm [resolvable:$true] %s43
      %s45 = sshll.u32 [#allocation7], 4
      %s46 = int_to_ptr.vmem [resolvable:$true] %s45
      %51 = dma.hbm_to_vmem [thread:$0]  %s44, 2048, %s46, [#allocation6], 128, 128, 8
    $region17: #{tpu_custom_call.1} parent=1 // pred_fallthru
      _
    // Predicated region
    $region18: #{tpu_custom_call.1} parent=1 // pred_check
      _
    $region19: #{tpu_custom_call.1} parent=1 // pred_check_branch
      %53 = sbr.rel (0) target = $region21
    $region20: #{tpu_custom_call.1} parent=1 // pred_region
      _
    $region21: #{tpu_custom_call.1} parent=1 // pred_fallthru
      _
    // Predicated region
    $region22: #{tpu_custom_call.1} parent=1 // pred_check
      _
    $region23: #{tpu_custom_call.1} parent=1 // pred_check_branch
      %55 = sbr.rel (0) target = $region25
    $region24: #{tpu_custom_call.1} parent=1 // pred_region
      %57 = dma.done [#allocation3], 128
    $region25: #{tpu_custom_call.1} parent=1 // pred_fallthru
      _
    // Predicated region
    $region26: #{tpu_custom_call.1} parent=1 // pred_check
      _
    $region27: #{tpu_custom_call.1} parent=1 // pred_check_branch
      %59 = sbr.rel (0) target = $region29
    $region28: #{tpu_custom_call.1} parent=1 // pred_region
      %61 = dma.done [#allocation6], 2048
    $region29: #{tpu_custom_call.1} parent=1 // pred_fallthru
      _
    // Predicated region
    $region30: #{tpu_custom_call.1} parent=1 // pred_check
      _
    $region31: #{tpu_custom_call.1} parent=1 // pred_check_branch
      %63 = sbr.rel (0) target = $region33
    $region32: #{tpu_custom_call.1} parent=1 // pred_region
      %65 = dma.done [#allocation6], 2048
    $region33: #{tpu_custom_call.1} parent=1 // pred_fallthru
      _
    %v66 = vld [vmem:[#allocation2] sm:$0xff]
    %v67 = vld [vmem:[#allocation5] sm:$0xff]
    %v68 = vld [vmem:[#allocation5 + $0x8] sm:$0xff]
    %v69 = vld [vmem:[#allocation5 + $0x10] sm:$0xff]
    %v70 = vld [vmem:[#allocation5 + $0x18] sm:$0xff]
    %v71 = vld [vmem:[#allocation5 + $0x20] sm:$0xff]
    %v72 = vld [vmem:[#allocation5 + $0x28] sm:$0xff]
    %v73 = vld [vmem:[#allocation5 + $0x30] sm:$0xff]
    %v74 = vld [vmem:[#allocation5 + $0x38] sm:$0xff]
    %v75 = vld [vmem:[#allocation5 + $0x40] sm:$0xff]
    %v76 = vld [vmem:[#allocation5 + $0x48] sm:$0xff]
    %v77 = vld [vmem:[#allocation5 + $0x50] sm:$0xff]
    %v78 = vld [vmem:[#allocation5 + $0x58] sm:$0xff]
    %v79 = vld [vmem:[#allocation5 + $0x60] sm:$0xff]
    %v80 = vld [vmem:[#allocation5 + $0x68] sm:$0xff]
    %v81 = vld [vmem:[#allocation5 + $0x70] sm:$0xff]
    %v82 = vld [vmem:[#allocation5 + $0x78] sm:$0xff]
    %v83 = vld [vmem:[%s2] sm:$0x1]
    %v85 = vperm.slane %v83, 0
    %87 = vmatpush.msra.mxu0 %v82
    %88 = vmatpush.msra.mxu0 %v81
    %89 = vmatpush.msra.mxu0 %v80
    %90 = vmatpush.msra.mxu0 %v79
    %91 = vmatpush.msra.mxu0 %v78
    %92 = vmatpush.msra.mxu0 %v77
    %93 = vmatpush.msra.mxu0 %v76
    %94 = vmatpush.msra.mxu0 %v75
    %95 = vmatpush.msra.mxu0 %v74
    %96 = vmatpush.msra.mxu0 %v73
    %97 = vmatpush.msra.mxu0 %v72
    %98 = vmatpush.msra.mxu0 %v71
    %99 = vmatpush.msra.mxu0 %v70
    %100 = vmatpush.msra.mxu0 %v69
    %101 = vmatpush.msra.mxu0 %v68
    %102 = vmatpush.msra.mxu0 %v67
    %103 = vmatmul.f32.gmra.mxu0 %v66
    %v104 = vpop.f32.mrf.mxu0
    %v105 = vadd.f32 %v85, %v104
    %106 = vdwg.mxu0
    %v107 = vsub.f32 0.0, %v105
    %v108 = vmul.f32 %v107, 1.442695
    %v109 = vpow.pop %v108
    %v110 = vadd.f32 %v109, 1.0
    %v111 = vrcp.pop %v110
    %v112 = vld [vmem:[#allocation7] sm:$0xff]
    %v113 = vld [vmem:[#allocation7 + $0x8] sm:$0xff]
    %v114 = vld [vmem:[#allocation7 + $0x10] sm:$0xff]
    %v115 = vld [vmem:[#allocation7 + $0x18] sm:$0xff]
    %v116 = vld [vmem:[#allocation7 + $0x20] sm:$0xff]
    %v117 = vld [vmem:[#allocation7 + $0x28] sm:$0xff]
    %v118 = vld [vmem:[#allocation7 + $0x30] sm:$0xff]
    %v119 = vld [vmem:[#allocation7 + $0x38] sm:$0xff]
    %v120 = vld [vmem:[#allocation7 + $0x40] sm:$0xff]
    %v121 = vld [vmem:[#allocation7 + $0x48] sm:$0xff]
    %v122 = vld [vmem:[#allocation7 + $0x50] sm:$0xff]
    %v123 = vld [vmem:[#allocation7 + $0x58] sm:$0xff]
    %v124 = vld [vmem:[#allocation7 + $0x60] sm:$0xff]
    %v125 = vld [vmem:[#allocation7 + $0x68] sm:$0xff]
    %v126 = vld [vmem:[#allocation7 + $0x70] sm:$0xff]
    %v127 = vld [vmem:[#allocation7 + $0x78] sm:$0xff]
    %v128 = vld [vmem:[%s4] sm:$0x1]
    %v130 = vperm.slane %v128, 0
    %132 = vmatpush.msra.mxu0 %v127
    %133 = vmatpush.msra.mxu0 %v126
    %134 = vmatpush.msra.mxu0 %v125
    %135 = vmatpush.msra.mxu0 %v124
    %136 = vmatpush.msra.mxu0 %v123
    %137 = vmatpush.msra.mxu0 %v122
    %138 = vmatpush.msra.mxu0 %v121
    %139 = vmatpush.msra.mxu0 %v120
    %140 = vmatpush.msra.mxu0 %v119
    %141 = vmatpush.msra.mxu0 %v118
    %142 = vmatpush.msra.mxu0 %v117
    %143 = vmatpush.msra.mxu0 %v116
    %144 = vmatpush.msra.mxu0 %v115
    %145 = vmatpush.msra.mxu0 %v114
    %146 = vmatpush.msra.mxu0 %v113
    %147 = vmatpush.msra.mxu0 %v112
    %148 = vmatmul.f32.gmra.mxu0 %v111
    %v149 = vpop.f32.mrf.mxu0
    %v150 = vadd.f32 %v130, %v149
    %151 = vdwg.mxu0
    %152 = vst [vmem:[#allocation8] sm:$0xff] %v150
    // Predicated region
    $region34: #{tpu_custom_call.1} parent=1 // pred_check
      _
    $region35: #{tpu_custom_call.1} parent=1 // pred_check_branch
      %154 = sbr.rel (0) target = $region37
    $region36: #{tpu_custom_call.1} parent=1 // pred_region
      %156 = vsyncadd [#allocation4], 0
      %s158 = sshll.u32 [#allocation8], 4
      %s159 = int_to_ptr.vmem [resolvable:$true] %s158
      %s160 = sshll.u32 %s5, 4
      %s161 = int_to_ptr.hbm [resolvable:$true] %s160
      %163 = dma.vmem_to_hbm [thread:$0]  %s159, 128, %s161, [#allocation4]
    $region37: #{tpu_custom_call.1} parent=1 // pred_fallthru
      _
    // Predicated region
    $region38: #{tpu_custom_call.1} parent=1 // pred_check
      _
    $region39: #{tpu_custom_call.1} parent=1 // pred_check_branch
      %165 = sbr.rel (0) target = $region41
    $region40: #{tpu_custom_call.1} parent=1 // pred_region
      %167 = dma.done [#allocation4], 128
    $region41: #{tpu_custom_call.1} parent=1 // pred_fallthru
      _
    %168 = vsyncpa [#allocation3], 1
    %169 = vsyncpa [#allocation6], 1
    %170 = vsyncpa [#allocation4], 1

</llo_original>
